<compile_context>
chip_gen: v7x
topology: tpu7x:2x2x1
jax: 0.10.0
libtpu: 0.0.40
codegen_flags: <defaults>
</compile_context>

<pallas_src>
import functools

import numpy as np
import jax
import jax.numpy as jnp
from jax.experimental import pallas as pl
from jax.experimental.pallas import tpu as pltpu

R = 0.995
IR_LEN = 2000                     # same length as scipy.signal.dimpulse(n=2000)
WINDOW_SIZES = (8, 16, 32, 64)    # RMSMLoss default


# ---------------------------------------------------------------------------
# host-side constant construction (numpy; cached per shape)
# ---------------------------------------------------------------------------

def _impulse_response(n=IR_LEN, r=R):
    # Closed form of H(z) = (1 - z^-1)/(1 - r z^-1): h[0] = 1, h[k] = (r-1) r^(k-1).
    k = np.arange(1, n)
    return np.concatenate([[1.0], (r - 1.0) * r ** (k - 1)]).astype(np.float32)


def _toeplitz_diag_blocks(tt, nb, ir):
    # Diagonal block d of the causal filter matrix G[t_in, t_out] = ir[t_out - t_in]:
    # G_d[r, c] = ir[d*tt + c - r]  (0 if out of [0, IR_LEN)).
    r = np.arange(tt)[:, None]
    c = np.arange(tt)[None, :]
    blocks = []
    for d in range(nb):
        lag = d * tt + c - r
        valid = (lag >= 0) & (lag < len(ir))
        blocks.append(np.where(valid, ir[np.clip(lag, 0, len(ir) - 1)], 0.0))
    return np.stack(blocks, axis=0).astype(np.float32)


def _window_matrix(T, w, B, n_sizes):
    # Column i of window size w averages window i (start i*step, length w, step w//4)
    # and is pre-scaled by 1/(w * B * n * n_sizes) so the kernel only needs one
    # matmul + sum(|.|)  (valid because |c*x| = c*|x| for c > 0).
    step = w // 4
    n = (T - w) // step + 1
    t = np.arange(T)[:, None]
    starts = (np.arange(n) * step)[None, :]
    scale = 1.0 / (w * B * n * n_sizes)
    return (((t >= starts) & (t < starts + w)).astype(np.float32) * scale)


# ---------------------------------------------------------------------------
# kernel
# ---------------------------------------------------------------------------

def _rmsm_kernel(x_ref, gd_ref, w_ref, loss_ref, y_acc, z_acc, *, B, NB):
    j = pl.program_id(0)          # output time tile
    k = pl.program_id(1)          # position within the FIR band
    nj = pl.num_programs(0)
    i = j - (NB - 1) + k          # input time tile feeding this (j, k)
    d = (NB - 1) - k              # Toeplitz diagonal offset (= j - i)

    @pl.when(jnp.logical_and(j == 0, k == 0))
    def _():
        z_acc[...] = jnp.zeros_like(z_acc)
        loss_ref[...] = jnp.zeros_like(loss_ref)

    @pl.when(k == 0)
    def _():
        y_acc[...] = jnp.zeros_like(y_acc)

    # Banded filter matmul: skip tiles left of the signal start (i < 0).
    @pl.when(i >= 0)
    def _():
        g = gd_ref[d].astype(jnp.float32)                       # (tt, tt)
        y_acc[...] += jnp.dot(x_ref[...], g,
                              preferred_element_type=jnp.float32)

    # Window stage: one matmul per output tile on the squared DIFFERENCE.
    @pl.when(k == NB - 1)
    def _():
        y = y_acc[...]                                          # (2B, tt) filtered
        sq = y * y
        diff = sq[B:, :] - sq[:B, :]                            # target - output
        z_acc[...] += jnp.dot(diff, w_ref[...],
                              preferred_element_type=jnp.float32)

    @pl.when(jnp.logical_and(j == nj - 1, k == NB - 1))
    def _():
        loss_ref[...] = jnp.sum(jnp.abs(z_acc[...])).reshape(1, 1)


# ---------------------------------------------------------------------------
# wrapper (constants cached & baked per (B, T, tt))
# ---------------------------------------------------------------------------

@functools.lru_cache(maxsize=None)
def _build_rmsm_fn(B, T, tt):
    assert T % tt == 0, "time_tile must divide T"
    assert tt % 128 == 0 or tt == T, "time_tile must be a multiple of 128 (or == T)"
    assert T >= max(WINDOW_SIZES), "signal shorter than the largest window"

    nj = T // tt
    d_max = (IR_LEN + tt - 2) // tt            # last nonzero Toeplitz diagonal (tiles)
    NB = min(nj, d_max + 1)                    # band width in tiles

    ir = _impulse_response()
    gdiag_np = _toeplitz_diag_blocks(tt, NB, ir)
    wcat_np = np.concatenate(
        [_window_matrix(T, w, B, len(WINDOW_SIZES)) for w in WINDOW_SIZES], axis=1)
    n_total = wcat_np.shape[1]
    n_pad = max(128, ((n_total + 127) // 128) * 128)   # lane-dense; zero cols -> |0|=0
    wcat_np = np.pad(wcat_np, ((0, 0), (0, n_pad - n_total)))

    # bf16 filter blocks halve the dominant constant bytes (ir[0]=1.0 is exact in bf16);
    # window matrix stays f32 so the fused 1/(w*B*n_w*4) scales are exact.
    gdiag_dev = jnp.asarray(gdiag_np, dtype=jnp.bfloat16)
    wcat_dev = jnp.asarray(wcat_np, dtype=jnp.float32)

    kernel = functools.partial(_rmsm_kernel, B=B, NB=NB)

    call = pl.pallas_call(
        kernel,
        out_shape=jax.ShapeDtypeStruct((1, 1), jnp.float32),
        grid_spec=pltpu.PrefetchScalarGridSpec(
            num_scalar_prefetch=0,
            grid=(nj, NB),
            in_specs=[
                # stacked signals: input time tile i = j - (NB-1) + k (clamped; the
                # i < 0 case is skipped in-kernel and the clamp re-uses block 0)
                pl.BlockSpec((2 * B, tt),
                             lambda j, k: (0, jnp.maximum(j - (NB - 1) + k, 0))),
                # all NB Toeplitz diagonal blocks stay VMEM-resident (constant index)
                pl.BlockSpec((NB, tt, tt), lambda j, k: (0, 0, 0)),
                # fused window matrix slab for output tile j (re-fetched only when j
                # changes, since the index is constant across k)
                pl.BlockSpec((tt, n_pad), lambda j, k: (j, 0)),
            ],
            out_specs=pl.BlockSpec((1, 1), lambda j, k: (0, 0)),
            scratch_shapes=[
                pltpu.VMEM((2 * B, tt), jnp.float32),   # filtered-tile accumulator
                pltpu.VMEM((B, n_pad), jnp.float32),    # per-window sum accumulator
            ],
        ),
        compiler_params=pltpu.CompilerParams(
            # both axes carry accumulators -> reductions (no parallel axis possible
            # for a scalar loss without a per-core partial output; see TODO above)
            dimension_semantics=("arbitrary", "arbitrary")),
    )

    @jax.jit
    def f(x_o2d, x_t2d):
        x = jnp.concatenate([x_o2d, x_t2d], axis=0).astype(jnp.float32)  # (2B, T)
        return call(x, gdiag_dev, wcat_dev)[0, 0]

    return f


def _pick_time_tile(T):
    for tt in (512, 256, 128):
        if T % tt == 0:
            return tt
    return T


def rmsm_loss(output, target, time_tile=None):
    """output, target: (B, T, 1) float32 -> scalar loss."""
    B, T, C = output.shape
    assert C == 1 and target.shape == output.shape
    tt = _pick_time_tile(T) if time_tile is None else int(time_tile)
    f = _build_rmsm_fn(int(B), int(T), tt)
    return f(output[..., 0].astype(jnp.float32), target[..., 0].astype(jnp.float32))


# ---------------------------------------------------------------------------
# pure-JAX reference (independent implementation for validation)
# ---------------------------------------------------------------------------

def rmsm_loss_ref(output, target):
    B, T, _ = output.shape
    ir = jnp.asarray(_impulse_response()[:T])   # taps beyond T never touch real data

    def fir(x2d):  # (B, T) causal FIR
        return jax.vmap(lambda v: jnp.convolve(v, ir)[:T])(x2d)

    y_o = fir(output[..., 0].astype(jnp.float32))
    y_t = fir(target[..., 0].astype(jnp.float32))

    total = jnp.float32(0.0)
    for w in WINDOW_SIZES:
        step = w // 4
        n = (T - w) // step + 1
        pos = (jnp.arange(n) * step)[:, None] + jnp.arange(w)[None, :]
        m_o = jnp.mean(y_o[:, pos] ** 2, axis=2)
        m_t = jnp.mean(y_t[:, pos] ** 2, axis=2)
        total = total + jnp.mean(jnp.abs(m_t - m_o))
    return total / len(WINDOW_SIZES)


if __name__ == "__main__":
    key = jax.random.PRNGKey(0)
    k1, k2 = jax.random.split(key)
    B, T = 2, 256
    output = jax.random.normal(k1, (B, T, 1), dtype=jnp.float32)
    target = jax.random.normal(k2, (B, T, 1), dtype=jnp.float32)

    ref = jax.block_until_ready(rmsm_loss_ref(output, target))

    # multi-tile banded path (exercises the grid, the i<0 skip and the diag reuse)
    loss_tiled = jax.block_until_ready(rmsm_loss(output, target, time_tile=128))
    assert bool(jnp.isfinite(loss_tiled))
    np.testing.assert_allclose(float(loss_tiled), float(ref), rtol=5e-3, atol=5e-3)

    # single-tile path (default tile = T)
    loss_full = jax.block_until_ready(rmsm_loss(output, target))
    assert bool(jnp.isfinite(loss_full))
    np.testing.assert_allclose(float(loss_full), float(ref), rtol=5e-3, atol=5e-3)

    print("KERNEL_OK")
</pallas_src>

<mosaic_0001>
module attributes {stable_mosaic.version = 11 : i64} {
  func.func @_rmsm_kernel(%arg0: i32, %arg1: i32, %arg2: memref<4x128xf32, #tpu.memory_space<vmem>>, %arg3: memref<2x128x128xbf16, #tpu.memory_space<vmem>>, %arg4: memref<128x256xf32, #tpu.memory_space<vmem>>, %arg5: memref<1x1xf32, #tpu.memory_space<vmem>>, %arg6: memref<4x128xf32, #tpu.memory_space<vmem>>, %arg7: memref<2x256xf32, #tpu.memory_space<vmem>>) attributes {dimension_semantics = [#tpu.dimension_semantics<arbitrary>, #tpu.dimension_semantics<arbitrary>], iteration_bounds = array<i64: 2, 2>, scalar_prefetch = 0 : i64, scratch_operands = 2 : i64, tpu.core_type = #tpu.core_type<tc>, window_params = [{transform_indices = @transform_0, window_bounds = array<i64: 4, 128>}, {pipeline_mode = #tpu.pipeline_mode<synchronous>, transform_indices = @transform_1, window_bounds = array<i64: 2, 128, 128>}, {transform_indices = @transform_2, window_bounds = array<i64: 128, 256>}, {pipeline_mode = #tpu.pipeline_mode<synchronous>, transform_indices = @transform_3, window_bounds = array<i64: 1, 1>}]} {
    %c1_i32 = arith.constant 1 : i32
    %0 = arith.subi %arg0, %c1_i32 : i32
    %1 = arith.addi %0, %arg1 : i32
    %c1_i32_0 = arith.constant 1 : i32
    %2 = arith.subi %c1_i32_0, %arg1 : i32
    %c0_i32 = arith.constant 0 : i32
    %3 = arith.cmpi eq, %arg0, %c0_i32 : i32
    %c0_i32_1 = arith.constant 0 : i32
    %4 = arith.cmpi eq, %arg1, %c0_i32_1 : i32
    %5 = arith.andi %3, %4 : i1
    %6 = arith.extui %5 : i1 to i32
    %c0_i32_2 = arith.constant 0 : i32
    %7 = arith.cmpi ne, %6, %c0_i32_2 : i32
    scf.if %7 {
      %cst = arith.constant 0.000000e+00 : f32
      %22 = vector.broadcast %cst : f32 to vector<2x256xf32>
      %c0 = arith.constant 0 : index
      %c0_12 = arith.constant 0 : index
      %23 = vector.load %arg7[%c0, %c0_12] : memref<2x256xf32, #tpu.memory_space<vmem>>, vector<2x256xf32>
      tpu.vector_store %arg7[%c0, %c0_12], %22 {strides = array<i32>} : memref<2x256xf32, #tpu.memory_space<vmem>>, vector<2x256xf32>,
      %cst_13 = arith.constant 0.000000e+00 : f32
      %24 = vector.broadcast %cst_13 : f32 to vector<1x1xf32>
      %c0_14 = arith.constant 0 : index
      %c0_15 = arith.constant 0 : index
      %25 = vector.load %arg5[%c0_14, %c0_15] : memref<1x1xf32, #tpu.memory_space<vmem>>, vector<1x1xf32>
      tpu.vector_store %arg5[%c0_14, %c0_15], %24 {strides = array<i32>} : memref<1x1xf32, #tpu.memory_space<vmem>>, vector<1x1xf32>,
    } else {
    }
    %c0_i32_3 = arith.constant 0 : i32
    %8 = arith.cmpi eq, %arg1, %c0_i32_3 : i32
    %9 = arith.extui %8 : i1 to i32
    %c0_i32_4 = arith.constant 0 : i32
    %10 = arith.cmpi ne, %9, %c0_i32_4 : i32
    scf.if %10 {
      %cst = arith.constant 0.000000e+00 : f32
      %22 = vector.broadcast %cst : f32 to vector<4x128xf32>
      %c0 = arith.constant 0 : index
      %c0_12 = arith.constant 0 : index
      %23 = vector.load %arg6[%c0, %c0_12] : memref<4x128xf32, #tpu.memory_space<vmem>>, vector<4x128xf32>
      tpu.vector_store %arg6[%c0, %c0_12], %22 {strides = array<i32>} : memref<4x128xf32, #tpu.memory_space<vmem>>, vector<4x128xf32>,
    } else {
    }
    %c0_i32_5 = arith.constant 0 : i32
    %11 = arith.cmpi sge, %1, %c0_i32_5 : i32
    %12 = arith.extui %11 : i1 to i32
    %c0_i32_6 = arith.constant 0 : i32
    %13 = arith.cmpi ne, %12, %c0_i32_6 : i32
    scf.if %13 {
      %22 = arith.index_cast %2 : i32 to index
      %c0 = arith.constant 0 : index
      %c0_12 = arith.constant 0 : index
      %23 = vector.load %arg3[%22, %c0, %c0_12] : memref<2x128x128xbf16, #tpu.memory_space<vmem>>, vector<1x128x128xbf16>
      %24 = vector.shape_cast %23 : vector<1x128x128xbf16> to vector<128x128xbf16>
      %25 = arith.extf %24 : vector<128x128xbf16> to vector<128x128xf32>
      %c0_13 = arith.constant 0 : index
      %c0_14 = arith.constant 0 : index
      %26 = vector.load %arg6[%c0_13, %c0_14] : memref<4x128xf32, #tpu.memory_space<vmem>>, vector<4x128xf32>
      %c0_15 = arith.constant 0 : index
      %c0_16 = arith.constant 0 : index
      %27 = vector.load %arg2[%c0_15, %c0_16] : memref<4x128xf32, #tpu.memory_space<vmem>>, vector<4x128xf32>
      %cst = arith.constant dense<0.000000e+00> : vector<4x128xf32>
      %28 = tpu.matmul %27, %25, %cst {dimension_numbers = #tpu.dot_dimension_numbers<[1], [0], [0], [1], [0, 0, 1, 1], [], []>} : vector<4x128xf32>, vector<128x128xf32>, vector<4x128xf32> -> vector<4x128xf32>
      %29 = arith.addf %26, %28 : vector<4x128xf32>
      %c0_17 = arith.constant 0 : index
      %c0_18 = arith.constant 0 : index
      %30 = vector.load %arg6[%c0_17, %c0_18] : memref<4x128xf32, #tpu.memory_space<vmem>>, vector<4x128xf32>
      tpu.vector_store %arg6[%c0_17, %c0_18], %29 {strides = array<i32>} : memref<4x128xf32, #tpu.memory_space<vmem>>, vector<4x128xf32>,
    } else {
    }
    %c1_i32_7 = arith.constant 1 : i32
    %14 = arith.cmpi eq, %arg1, %c1_i32_7 : i32
    %15 = arith.extui %14 : i1 to i32
    %c0_i32_8 = arith.constant 0 : i32
    %16 = arith.cmpi ne, %15, %c0_i32_8 : i32
    scf.if %16 {
      %c0 = arith.constant 0 : index
      %c0_12 = arith.constant 0 : index
      %22 = vector.load %arg6[%c0, %c0_12] : memref<4x128xf32, #tpu.memory_space<vmem>>, vector<4x128xf32>
      %23 = arith.mulf %22, %22 : vector<4x128xf32>
      %24 = vector.extract_strided_slice %23 {offsets = [2, 0], sizes = [2, 128], strides = [1, 1]} : vector<4x128xf32> to vector<2x128xf32>
      %25 = vector.extract_strided_slice %23 {offsets = [0, 0], sizes = [2, 128], strides = [1, 1]} : vector<4x128xf32> to vector<2x128xf32>
      %26 = arith.subf %24, %25 : vector<2x128xf32>
      %c0_13 = arith.constant 0 : index
      %c0_14 = arith.constant 0 : index
      %27 = vector.load %arg7[%c0_13, %c0_14] : memref<2x256xf32, #tpu.memory_space<vmem>>, vector<2x256xf32>
      %c0_15 = arith.constant 0 : index
      %c0_16 = arith.constant 0 : index
      %28 = vector.load %arg4[%c0_15, %c0_16] : memref<128x256xf32, #tpu.memory_space<vmem>>, vector<128x256xf32>
      %cst = arith.constant dense<0.000000e+00> : vector<2x256xf32>
      %29 = tpu.matmul %26, %28, %cst {dimension_numbers = #tpu.dot_dimension_numbers<[1], [0], [0], [1], [0, 0, 1, 1], [], []>} : vector<2x128xf32>, vector<128x256xf32>, vector<2x256xf32> -> vector<2x256xf32>
      %30 = arith.addf %27, %29 : vector<2x256xf32>
      %c0_17 = arith.constant 0 : index
      %c0_18 = arith.constant 0 : index
      %31 = vector.load %arg7[%c0_17, %c0_18] : memref<2x256xf32, #tpu.memory_space<vmem>>, vector<2x256xf32>
      tpu.vector_store %arg7[%c0_17, %c0_18], %30 {strides = array<i32>} : memref<2x256xf32, #tpu.memory_space<vmem>>, vector<2x256xf32>,
    } else {
    }
    %c1_i32_9 = arith.constant 1 : i32
    %17 = arith.cmpi eq, %arg0, %c1_i32_9 : i32
    %c1_i32_10 = arith.constant 1 : i32
    %18 = arith.cmpi eq, %arg1, %c1_i32_10 : i32
    %19 = arith.andi %17, %18 : i1
    %20 = arith.extui %19 : i1 to i32
    %c0_i32_11 = arith.constant 0 : i32
    %21 = arith.cmpi ne, %20, %c0_i32_11 : i32
    scf.if %21 {
      %c0 = arith.constant 0 : index
      %c0_12 = arith.constant 0 : index
      %22 = vector.load %arg7[%c0, %c0_12] : memref<2x256xf32, #tpu.memory_space<vmem>>, vector<2x256xf32>
      %23 = math.absf %22 : vector<2x256xf32>
      %24 = vector.shape_cast %23 : vector<2x256xf32> to vector<1x2x256xf32>
      %cst = arith.constant dense<0.000000e+00> : vector<1xf32>
      %25 = vector.multi_reduction <add>, %24, %cst [1, 2] : vector<1x2x256xf32> to vector<1xf32>
      %26 = vector.shape_cast %25 : vector<1xf32> to vector<1x1x1xf32>
      %27 = vector.extract %26[0, 0, 0] : f32 from vector<1x1x1xf32>
      %28 = vector.broadcast %27 : f32 to vector<1x1xf32>
      %c0_13 = arith.constant 0 : index
      %c0_14 = arith.constant 0 : index
      %29 = vector.load %arg5[%c0_13, %c0_14] : memref<1x1xf32, #tpu.memory_space<vmem>>, vector<1x1xf32>
      tpu.vector_store %arg5[%c0_13, %c0_14], %28 {strides = array<i32>} : memref<1x1xf32, #tpu.memory_space<vmem>>, vector<1x1xf32>,
    } else {
    }
    return
  }
  func.func @transform_0(%arg0: i32, %arg1: i32) -> (i32, i32) {
    %c1_i32 = arith.constant 1 : i32
    %0 = arith.subi %arg0, %c1_i32 : i32
    %1 = arith.addi %0, %arg1 : i32
    %c0_i32 = arith.constant 0 : i32
    %2 = arith.maxsi %1, %c0_i32 : i32
    %c0_i32_0 = arith.constant 0 : i32
    %c0_i32_1 = arith.constant 0 : i32
    return %c0_i32_0, %2 : i32, i32
  }
  func.func @transform_1(%arg0: i32, %arg1: i32) -> (i32, i32, i32) {
    %c0_i32 = arith.constant 0 : i32
    %c0_i32_0 = arith.constant 0 : i32
    %c0_i32_1 = arith.constant 0 : i32
    %c0_i32_2 = arith.constant 0 : i32
    return %c0_i32, %c0_i32_0, %c0_i32_1 : i32, i32, i32
  }
  func.func @transform_2(%arg0: i32, %arg1: i32) -> (i32, i32) {
    %c0_i32 = arith.constant 0 : i32
    %c0_i32_0 = arith.constant 0 : i32
    return %arg0, %c0_i32 : i32, i32
  }
  func.func @transform_3(%arg0: i32, %arg1: i32) -> (i32, i32) {
    %c0_i32 = arith.constant 0 : i32
    %c0_i32_0 = arith.constant 0 : i32
    %c0_i32_1 = arith.constant 0 : i32
    return %c0_i32, %c0_i32_0 : i32, i32
  }
}

</mosaic_0001>

<llo_original>
// kernel: f.1
$region0: #{f.1}
  #allocation0 [shape = 'u32[]', space=smem, size = 0x4, offset = 0x4, fixed_abs, tag = 'smem constant byte address 0x4 - core index']
  #allocation1 [shape = 'u32[144,128]{1,0:T(1,128)}', space=vmem, size = 0x12000, scoped, tag = 'internal scratch']
  #allocation2 [shape = 'f32[4,128]{1,0:T(4,128)}', space=vmem, size = 0x800, scoped, tag = 'scratch operand']
  #allocation3 [shape = 'f32[2,256]{1,0:T(2,128)}', space=vmem, size = 0x800, scoped, tag = 'scratch operand']
  %s0 = inlined_call_operand.vmem [shape: f32[4,256], index: 0, kind: input, shape index: {}]
  %s1 = inlined_call_operand.hbm [shape: bf16[2,128,128], index: 1, kind: input, shape index: {}]
  %s2 = inlined_call_operand.hbm [shape: f32[256,256], index: 2, kind: input, shape index: {}]
  %s3 = inlined_call_operand.hbm [shape: f32[1,1], index: 3, kind: output, shape index: {}]
  %s4 = sld [smem:[#allocation0]]
  $region73: #{f.1} parent=0
    _
  %s6 = ssub.s32 1, %s4
  %s7 = scalar_select 0, %s6, %s4
  $region1: #{f.1} parent=0
    #allocation4 [shape = 'u8[65536]{0}', space=vmem, size = 0x10000, scoped, tag = 'input window, operand 1, single buffered']
    #allocation5 [shape = 's32[2]{0}', space=sflag, size = 0x8, scoped, tag = 'scoped memory for f.1']
    #allocation6 [shape = 's32[2]{0}', space=sflag, size = 0x8, scoped, tag = 'scoped memory for f.1']
    #allocation7 [shape = 'u8[262144]{0}', space=vmem, size = 0x40000, scoped, tag = 'input window, operand 2']
    #allocation8 [shape = 's32[2]{0}', space=sflag, size = 0x8, scoped, tag = 'scoped memory for f.1']
    #allocation9 [shape = 'u8[512]{0}', space=vmem, size = 0x400, scoped, tag = 'output window, operand 0, single buffered']
    %8 = vsyncpa [#allocation5], 0
    %9 = vsyncpa [#allocation8], 0
    %s10 = scalar_lea.sflag [#allocation8], 1
    %11 = vsyncpa %s10, 0
    %12 = vsyncpa [#allocation6], 0
    loop: start=0, step=1, limit=6
    $region2: #{f.1} parent=1 // loop_pre_header
      _
    $region3: #{f.1} parent=1 // loop_header
      %s14 = sphi 0, %s18
      %p15 = scmp.ge.s32.totalorder %s14, 6
      %s21 = sphi 0, %s33
      %s22 = sphi 0, %s29
      %s23 = sphi 0, %s21
      %s24 = sphi 0, %s22
      %s25 = sphi 0, %s23
      %s26 = sphi 0, %s24
      %s44 = sphi 0, %s46
      %s47 = sphi 0, %s44
      %s48 = sphi 0, %s47
      %s64 = sphi 0, %s48
      %s68 = sphi 0, %s68
      %s70 = sphi 0, %s68
      %s71 = sphi 0, %s70
      %s85 = sphi 0, %s71
      %s91 = sphi 0, %s93
      %s94 = sphi 0, %s91
      %s95 = sphi 0, %s94
      %s111 = sphi 0, %s95
      %s115 = sphi 0, %s115
      %s117 = sphi 0, %s115
      %s118 = sphi 0, %s117
      %s132 = sphi 0, %s118
    $region4: #{f.1} parent=1 // loop_header_branch
      %17 = sbr.rel (%p15) target = $region8
    $region5: #{f.1} parent=1 // loop_body
      %s19 = ssub.s32 %s14, 1
      %s20 = ssub.s32 %s14, 2
      %s27 = sadd.s32 1, %s22
      %p28 = scmp.ge.s32.totalorder %s27, 2
      %s29 = scalar_select %p28, 0, %s27
      %s30 = sadd.s32 1, %s21
      %s31 = scalar_select %p28, %s30, %s21
      %p32 = scmp.ge.s32.totalorder %s31, 2
      %s33 = scalar_select %p32, 0, %s31
      %s34 = ssub.s32 %s21, 1
      %s35 = sadd.s32 %s34, %s22
      %p36 = scmp.gt.s32.totalorder %s35, 0
      %s37 = scalar_select %p36, %s35, 0
      %s38 = ssub.s32 %s33, 1
      %s39 = sadd.s32 %s38, %s29
      %p40 = scmp.gt.s32.totalorder %s39, 0
      %s41 = scalar_select %p40, %s39, 0
      %s42 = ssub.s32 %s37, %s41
      %p43 = scmp.eq.s32.totalorder %s42, 0
      %s45 = sadd.s32 %s44, 1
      %s46 = scalar_select %p43, %s44, %s45
      %p49 = pneg %p43
      %p50 = scmp.eq.s32.totalorder %s14, 3
      %p51 = por %p49, %p50
      %p52 = scmp.ne.s32.totalorder %s44, %s47
      %p53 = scmp.eq.s32.totalorder %s14, 0
      %p54 = por %p52, %p53
      %p55 = scmp.ne.s32.totalorder %s44, %s47
      %p56 = scmp.eq.s32.totalorder %s19, 3
      %p57 = por %p55, %p56
      %p58 = scmp.ne.s32.totalorder %s47, %s48
      %p59 = scmp.eq.s32.totalorder %s19, 0
      %p60 = por %p58, %p59
      %p61 = scmp.ne.s32.totalorder %s47, %s48
      %p62 = scmp.eq.s32.totalorder %s20, 3
      %p63 = por %p61, %p62
      %p65 = scmp.ne.s32.totalorder %s48, %s64
      %p66 = scmp.eq.s32.totalorder %s20, 0
      %p67 = por %p65, %p66
      %s69 = sadd.s32 %s68, 1
      %p72 = scmp.eq.s32.totalorder %s14, 3
      %p73 = scmp.ne.s32.totalorder %s68, %s70
      %p74 = scmp.eq.s32.totalorder %s14, 0
      %p75 = por %p73, %p74
      %p76 = scmp.ne.s32.totalorder %s68, %s70
      %p77 = scmp.eq.s32.totalorder %s19, 3
      %p78 = por %p76, %p77
      %p79 = scmp.ne.s32.totalorder %s70, %s71
      %p80 = scmp.eq.s32.totalorder %s19, 0
      %p81 = por %p79, %p80
      %p82 = scmp.ne.s32.totalorder %s70, %s71
      %p83 = scmp.eq.s32.totalorder %s20, 3
      %p84 = por %p82, %p83
      %p86 = scmp.ne.s32.totalorder %s71, %s85
      %p87 = scmp.eq.s32.totalorder %s20, 0
      %p88 = por %p86, %p87
      %s89 = ssub.s32 %s21, %s33
      %p90 = scmp.eq.s32.totalorder %s89, 0
      %s92 = sadd.s32 %s91, 1
      %s93 = scalar_select %p90, %s91, %s92
      %p96 = pneg %p90
      %p97 = scmp.eq.s32.totalorder %s14, 3
      %p98 = por %p96, %p97
      %p99 = scmp.ne.s32.totalorder %s91, %s94
      %p100 = scmp.eq.s32.totalorder %s14, 0
      %p101 = por %p99, %p100
      %p102 = scmp.ne.s32.totalorder %s91, %s94
      %p103 = scmp.eq.s32.totalorder %s19, 3
      %p104 = por %p102, %p103
      %p105 = scmp.ne.s32.totalorder %s94, %s95
      %p106 = scmp.eq.s32.totalorder %s19, 0
      %p107 = por %p105, %p106
      %p108 = scmp.ne.s32.totalorder %s94, %s95
      %p109 = scmp.eq.s32.totalorder %s20, 3
      %p110 = por %p108, %p109
      %p112 = scmp.ne.s32.totalorder %s95, %s111
      %p113 = scmp.eq.s32.totalorder %s20, 0
      %p114 = por %p112, %p113
      %s116 = sadd.s32 %s115, 1
      %p119 = scmp.eq.s32.totalorder %s14, 3
      %p120 = scmp.ne.s32.totalorder %s115, %s117
      %p121 = scmp.eq.s32.totalorder %s14, 0
      %p122 = por %p120, %p121
      %p123 = scmp.ne.s32.totalorder %s115, %s117
      %p124 = scmp.eq.s32.totalorder %s19, 3
      %p125 = por %p123, %p124
      %p126 = scmp.ne.s32.totalorder %s117, %s118
      %p127 = scmp.eq.s32.totalorder %s19, 0
      %p128 = por %p126, %p127
      %p129 = scmp.ne.s32.totalorder %s117, %s118
      %p130 = scmp.eq.s32.totalorder %s20, 3
      %p131 = por %p129, %p130
      %p133 = scmp.ne.s32.totalorder %s118, %s132
      %p134 = scmp.eq.s32.totalorder %s20, 0
      %p135 = por %p133, %p134
      %p136 = scmp.le.s32.totalorder 1, %s14
      %p137 = scmp.lt.s32.totalorder %s14, 5
      %p138 = pnand %p136, %p137
      %p139 = pneg %p138
      // Predicated region
      $region9: #{f.1} parent=5 // pred_check
        _
      $region10: #{f.1} parent=5 // pred_check_branch
        %141 = sbr.rel (%p138) target = $region12
      $region11: #{f.1} parent=5 // pred_region
        %s142 = ssub.s32 %s14, 1
        // Predicated region
        $region13: #{f.1} parent=11 // pred_check
          %p143 = pneg %p81
        $region14: #{f.1} parent=11 // pred_check_branch
          %145 = sbr.rel (%p143) target = $region16
        $region15: #{f.1} parent=11 // pred_region
          %s147 = ssub.s32 2048, 2048
          %148 = vsyncadd [#allocation5], %s147
          %s149 = sshll.u32 [#allocation4], 4
          %s150 = int_to_ptr.vmem [resolvable:$true] %s149
          %155 = dma.hbm_to_vmem [thread:$0]  %s1, 2048, %s150, [#allocation5], 64, 64, 4
        $region16: #{f.1} parent=11 // pred_fallthru
          _
      $region12: #{f.1} parent=5 // pred_fallthru
        _
      %p156 = scmp.lt.s32.totalorder %s14, 4
      // Predicated region
      $region17: #{f.1} parent=5 // pred_check
        %p157 = pneg %p156
      $region18: #{f.1} parent=5 // pred_check_branch
        %159 = sbr.rel (%p157) target = $region20
      $region19: #{f.1} parent=5 // pred_region
        // Predicated region
        $region21: #{f.1} parent=19 // pred_check
          %p160 = pneg %p54
        $region22: #{f.1} parent=19 // pred_check_branch
          %162 = sbr.rel (%p160) target = $region24
        $region23: #{f.1} parent=19 // pred_region
          %s163 = ssub.s32 %s21, 1
          %s164 = sadd.s32 %s163, %s22
          %p165 = scmp.gt.s32.totalorder %s164, 0
          %s166 = scalar_select %p165, %s164, 0
          %p167 = scmp.lt.s32.totalorder %s166, 1
          %s168 = scalar_select %p167, %s166, 1
          %s169 = smul.addr %s168, 4
          %s170 = scalar_lea.vmem %s0, %s169
          %s171 = ssub.s32 %s21, 1
          %s172 = sadd.s32 %s171, %s22
          %p173 = scmp.gt.s32.totalorder %s172, 0
          %s174 = scalar_select %p173, %s172, 0
        $region24: #{f.1} parent=19 // pred_fallthru
          _
        // Predicated region
        $region25: #{f.1} parent=19 // pred_check
          %p175 = pneg %p101
        $region26: #{f.1} parent=19 // pred_check_branch
          %177 = sbr.rel (%p175) target = $region28
        $region27: #{f.1} parent=19 // pred_region
          %s178 = sand.u32 %s91, 1
          %s179 = scalar_lea.sflag [#allocation8], %s178
          %s180 = sand.u32 %s91, 1
          %s181 = smul.addr %s180, 256
          %s182 = scalar_lea.vmem [#allocation7], %s181
          %s183 = smul.u32 16, %s21
          %s185 = ssub.s32 4096, 4096
          %186 = vsyncadd %s179, %s185
          %s187 = smul.addr %s183, 2
          %s188 = smul.addr %s187, 128
          %s189 = scalar_lea.hbm %s2, %s188
          %s190 = sshll.u32 %s182, 4
          %s191 = int_to_ptr.vmem [resolvable:$true] %s190
          %196 = dma.hbm_to_vmem [thread:$0]  %s189, 4096, %s191, %s179, 256, 256, 16
        $region28: #{f.1} parent=19 // pred_fallthru
          _
      $region20: #{f.1} parent=5 // pred_fallthru
        _
      %p197 = scmp.le.s32.totalorder 1, %s14
      %p198 = scmp.lt.s32.totalorder %s14, 5
      %p199 = pnand %p197, %p198
      %p200 = pneg %p199
      // Predicated region
      $region29: #{f.1} parent=5 // pred_check
        _
      $region30: #{f.1} parent=5 // pred_check_branch
        %202 = sbr.rel (%p199) target = $region32
      $region31: #{f.1} parent=5 // pred_region
        %s203 = ssub.s32 %s14, 1
        // Predicated region
        $region33: #{f.1} parent=31 // pred_check
          %p204 = pneg %p81
        $region34: #{f.1} parent=31 // pred_check_branch
          %206 = sbr.rel (%p204) target = $region36
        $region35: #{f.1} parent=31 // pred_region
          %207 = dma.done [#allocation5], 2048
        $region36: #{f.1} parent=31 // pred_fallthru
          _
        %s208 = sand.u32 %s94, 1
        %s209 = scalar_lea.sflag [#allocation8], %s208
        %s210 = sand.u32 %s94, 1
        %s211 = smul.addr %s210, 256
        %s212 = scalar_lea.vmem [#allocation7], %s211
        // Predicated region
        $region37: #{f.1} parent=31 // pred_check
          %p213 = pneg %p107
        $region38: #{f.1} parent=31 // pred_check_branch
          %215 = sbr.rel (%p213) target = $region40
        $region39: #{f.1} parent=31 // pred_region
          %216 = dma.done %s209, 4096
        $region40: #{f.1} parent=31 // pred_fallthru
          _
        %s217 = ssub.s32 %s23, 1
        %s218 = sadd.s32 %s217, %s24
        %p219 = scmp.gt.s32.totalorder %s218, 0
        %s220 = scalar_select %p219, %s218, 0
        %p221 = scmp.lt.s32.totalorder %s220, 1
        %s222 = scalar_select %p221, %s220, 1
        %s223 = smul.addr %s222, 4
        %s224 = scalar_lea.vmem %s0, %s223
        %p225 = pneg %p60
        %p226 = pneg %p57
        %p227 = pneg %p81
        %p228 = pneg %p78
        %s229 = sand.u32 %s94, 1
        %s230 = scalar_lea.sflag [#allocation8], %s229
        %s231 = sand.u32 %s94, 1
        %s232 = smul.addr %s231, 256
        %s233 = scalar_lea.vmem [#allocation7], %s232
        %p234 = pneg %p107
        %p235 = pneg %p104
        %p236 = pneg %p128
        %p237 = pneg %p125
        %s238 = ssub.s32 %s23, 1
        %s239 = sadd.s32 %s238, %s24
        %p240 = scmp.gt.s32.totalorder %s239, 0
        %s241 = scalar_select %p240, %s239, 0
        %p242 = scmp.lt.s32.totalorder %s241, 1
        %s243 = scalar_select %p242, %s241, 1
        %s244 = smul.addr %s243, 4
        %s245 = scalar_lea.vmem %s0, %s244
        %s246 = ssub.s32 %s23, 1
        %s247 = sadd.s32 %s246, %s24
        %p248 = scmp.gt.s32.totalorder %s247, 0
        %s249 = scalar_select %p248, %s247, 0
        %s250 = smul.u32 16, %s23
        %s251 = ssub.s32 %s23, 1
        %s252 = sadd.s32 %s251, %s24
        %s253 = ssub.s32 1, %s24
        %p254 = scmp.eq.s32.totalorder %s23, 0
        %p255 = scmp.eq.s32.totalorder %s24, 0
        %p256 = pnand %p254, %p255
        %p257 = pneg %p256
        // Predicated region
        $region41: #{f.1} parent=31 // pred_check
          _
        $region42: #{f.1} parent=31 // pred_check_branch
          %259 = sbr.rel (%p256) target = $region44
        $region43: #{f.1} parent=31 // pred_region
          %260 = vst [vmem:[#allocation3] sm:$0xf] 0.0
          %vm261 = vcmask 0
          %262 = vst.msk [vmem:[#allocation9] sm:$0x1] %vm261, 0.0
        $region44: #{f.1} parent=31 // pred_fallthru
          _
        // Predicated region
        $region45: #{f.1} parent=31 // pred_check
          %p263 = pneg %p255
        $region46: #{f.1} parent=31 // pred_check_branch
          %265 = sbr.rel (%p263) target = $region48
        $region47: #{f.1} parent=31 // pred_region
          %266 = vst [vmem:[#allocation2] sm:$0xf] 0.0
        $region48: #{f.1} parent=31 // pred_fallthru
          _
        %p267 = scmp.ge.s32.totalorder %s252, 0
        // Predicated region
        $region49: #{f.1} parent=31 // pred_check
          %p268 = pneg %p267
        $region50: #{f.1} parent=31 // pred_check_branch
          %270 = sbr.rel (%p268) target = $region52
        $region51: #{f.1} parent=31 // pred_region
          %s271 = smul.u32 %s253, 16
          %s272 = smul.addr %s271, 4
          %s273 = scalar_lea.vmem [#allocation4], %s272
          %v274 = vld [vmem:[%s273] sm:$0xf]
          %v275 = vld [vmem:[%s273 + $0x4] sm:$0xf]
          %v276 = vld [vmem:[%s273 + $0x8] sm:$0xf]
          %v277 = vld [vmem:[%s273 + $0xc] sm:$0xf]
          %v278 = vld [vmem:[%s273 + $0x10] sm:$0xf]
          %v279 = vld [vmem:[%s273 + $0x14] sm:$0xf]
          %v280 = vld [vmem:[%s273 + $0x18] sm:$0xf]
          %v281 = vld [vmem:[%s273 + $0x1c] sm:$0xf]
          %v282 = vld [vmem:[%s273 + $0x20] sm:$0xf]
          %v283 = vld [vmem:[%s273 + $0x24] sm:$0xf]
          %v284 = vld [vmem:[%s273 + $0x28] sm:$0xf]
          %v285 = vld [vmem:[%s273 + $0x2c] sm:$0xf]
          %v286 = vld [vmem:[%s273 + $0x30] sm:$0xf]
          %v287 = vld [vmem:[%s273 + $0x34] sm:$0xf]
          %v288 = vld [vmem:[%s273 + $0x38] sm:$0xf]
          %v289 = vld [vmem:[%s273 + $0x3c] sm:$0xf]
          %v290 = vunpack.c.l.bf16 %v274
          %v291 = vunpack.c.l.bf16 %v275
          %v292 = vunpack.c.l.bf16 %v276
          %v293 = vunpack.c.l.bf16 %v277
          %v294 = vunpack.c.l.bf16 %v278
          %v295 = vunpack.c.l.bf16 %v279
          %v296 = vunpack.c.l.bf16 %v280
          %v297 = vunpack.c.l.bf16 %v281
          %v298 = vunpack.c.l.bf16 %v282
          %v299 = vunpack.c.l.bf16 %v283
          %v300 = vunpack.c.l.bf16 %v284
          %v301 = vunpack.c.l.bf16 %v285
          %v302 = vunpack.c.l.bf16 %v286
          %v303 = vunpack.c.l.bf16 %v287
          %v304 = vunpack.c.l.bf16 %v288
          %v305 = vunpack.c.l.bf16 %v289
          %v306 = vld [vmem:[#allocation2] sm:$0xf]
          %v307 = vld [vmem:[%s245] sm:$0xf]
          %308 = vmatprep.subr.mxu0 0.0
          %309 = vmatpush1.msra.mxu0 %v290
          %310 = vmatprep.subr.mxu0 0.0
          %311 = vmatpush1.msra.mxu0 %v291
          %312 = vmatprep.subr.mxu0 0.0
          %313 = vmatpush1.msra.mxu0 %v292
          %314 = vmatprep.subr.mxu0 0.0
          %315 = vmatpush1.msra.mxu0 %v293
          %316 = vmatprep.subr.mxu0 0.0
          %317 = vmatpush1.msra.mxu0 %v294
          %318 = vmatprep.subr.mxu0 0.0
          %319 = vmatpush1.msra.mxu0 %v295
          %320 = vmatprep.subr.mxu0 0.0
          %321 = vmatpush1.msra.mxu0 %v296
          %322 = vmatprep.subr.mxu0 0.0
          %323 = vmatpush1.msra.mxu0 %v297
          %324 = vmatprep.subr.mxu0 0.0
          %325 = vmatpush1.msra.mxu0 %v298
          %326 = vmatprep.subr.mxu0 0.0
          %327 = vmatpush1.msra.mxu0 %v299
          %328 = vmatprep.subr.mxu0 0.0
          %329 = vmatpush1.msra.mxu0 %v300
          %330 = vmatprep.subr.mxu0 0.0
          %331 = vmatpush1.msra.mxu0 %v301
          %332 = vmatprep.subr.mxu0 0.0
          %333 = vmatpush1.msra.mxu0 %v302
          %334 = vmatprep.subr.mxu0 0.0
          %335 = vmatpush1.msra.mxu0 %v303
          %336 = vmatprep.subr.mxu0 0.0
          %337 = vmatpush1.msra.mxu0 %v304
          %338 = vmatprep.subr.mxu0 0.0
          %339 = vmatpush1.msra.mxu0 %v305
          %340 = vmatprep.subr.mxu0 0.0
          %341 = vmatpush1.msra.mxu0 0.0
          %342 = vmatprep.subr.mxu0 0.0
          %343 = vmatpush1.msra.mxu0 0.0
          %344 = vmatprep.subr.mxu0 0.0
          %345 = vmatpush1.msra.mxu0 0.0
          %346 = vmatprep.subr.mxu0 0.0
          %347 = vmatpush1.msra.mxu0 0.0
          %348 = vmatprep.subr.mxu0 0.0
          %349 = vmatpush1.msra.mxu0 0.0
          %350 = vmatprep.subr.mxu0 0.0
          %351 = vmatpush1.msra.mxu0 0.0
          %352 = vmatprep.subr.mxu0 0.0
          %353 = vmatpush1.msra.mxu0 0.0
          %354 = vmatprep.subr.mxu0 0.0
          %355 = vmatpush1.msra.mxu0 0.0
          %356 = vmatprep.subr.mxu0 0.0
          %357 = vmatpush1.msra.mxu0 0.0
          %358 = vmatprep.subr.mxu0 0.0
          %359 = vmatpush1.msra.mxu0 0.0
          %360 = vmatprep.subr.mxu0 0.0
          %361 = vmatpush1.msra.mxu0 0.0
          %362 = vmatprep.subr.mxu0 0.0
          %363 = vmatpush1.msra.mxu0 0.0
          %364 = vmatprep.subr.mxu0 0.0
          %365 = vmatpush1.msra.mxu0 0.0
          %366 = vmatprep.subr.mxu0 0.0
          %367 = vmatpush1.msra.mxu0 0.0
          %368 = vmatprep.subr.mxu0 0.0
          %369 = vmatpush1.msra.mxu0 0.0
          %370 = vmatprep.subr.mxu0 0.0
          %371 = vmatpush1.msra.mxu0 0.0
          %372 = vmatprep.mubr.f32.mxu0 0.0
          %373 = vmatmul.mubr.f32.gmra.mrb[0].mxu0 %v307
          %v374 = vpop.f32.mrb[0].mxu0
          %v375 = vadd.f32 0.0, %v374
          %v376 = vpop.f32.mrb[0].mxu0
          %377 = vdwg.mxu0
          %v378 = vadd.f32 %v306, %v375
          %379 = vst [vmem:[#allocation2] sm:$0xf] %v378
        $region52: #{f.1} parent=31 // pred_fallthru
          _
        %p380 = scmp.eq.s32.totalorder %s24, 1
        // Predicated region
        $region53: #{f.1} parent=31 // pred_check
          %p381 = pneg %p380
        $region54: #{f.1} parent=31 // pred_check_branch
          %383 = sbr.rel (%p381) target = $region56
        $region55: #{f.1} parent=31 // pred_region
          %v384 = vld [vmem:[#allocation2] sm:$0xf]
          %v385 = vmul.f32 %v384, %v384
          %v387 = vrot.slane %v385, 6
          %v389 = vsub.f32 %v385, %v387
          %v390 = vld [vmem:[#allocation3] sm:$0xf]
          %v391 = vld [vmem:[%s212] sm:$0xff]
          %v392 = vld [vmem:[%s212 + $0x8] sm:$0xff]
          %v393 = vld [vmem:[%s212 + $0x10] sm:$0xff]
          %v394 = vld [vmem:[%s212 + $0x18] sm:$0xff]
          %v395 = vld [vmem:[%s212 + $0x20] sm:$0xff]
          %v396 = vld [vmem:[%s212 + $0x28] sm:$0xff]
          %v397 = vld [vmem:[%s212 + $0x30] sm:$0xff]
          %v398 = vld [vmem:[%s212 + $0x38] sm:$0xff]
          %v399 = vld [vmem:[%s212 + $0x40] sm:$0xff]
          %v400 = vld [vmem:[%s212 + $0x48] sm:$0xff]
          %v401 = vld [vmem:[%s212 + $0x50] sm:$0xff]
          %v402 = vld [vmem:[%s212 + $0x58] sm:$0xff]
          %v403 = vld [vmem:[%s212 + $0x60] sm:$0xff]
          %v404 = vld [vmem:[%s212 + $0x68] sm:$0xff]
          %v405 = vld [vmem:[%s212 + $0x70] sm:$0xff]
          %v406 = vld [vmem:[%s212 + $0x78] sm:$0xff]
          %v407 = vld [vmem:[%s212 + $0x80] sm:$0xff]
          %v408 = vld [vmem:[%s212 + $0x88] sm:$0xff]
          %v409 = vld [vmem:[%s212 + $0x90] sm:$0xff]
          %v410 = vld [vmem:[%s212 + $0x98] sm:$0xff]
          %v411 = vld [vmem:[%s212 + $0xa0] sm:$0xff]
          %v412 = vld [vmem:[%s212 + $0xa8] sm:$0xff]
          %v413 = vld [vmem:[%s212 + $0xb0] sm:$0xff]
          %v414 = vld [vmem:[%s212 + $0xb8] sm:$0xff]
          %v415 = vld [vmem:[%s212 + $0xc0] sm:$0xff]
          %v416 = vld [vmem:[%s212 + $0xc8] sm:$0xff]
          %v417 = vld [vmem:[%s212 + $0xd0] sm:$0xff]
          %v418 = vld [vmem:[%s212 + $0xd8] sm:$0xff]
          %v419 = vld [vmem:[%s212 + $0xe0] sm:$0xff]
          %v420 = vld [vmem:[%s212 + $0xe8] sm:$0xff]
          %v421 = vld [vmem:[%s212 + $0xf0] sm:$0xff]
          %v422 = vld [vmem:[%s212 + $0xf8] sm:$0xff]
          %v424 = vrot.slane %v389, 2
          %426 = vmatprep.subr.mxu0 %v392
          %427 = vmatpush1.msra.mxu0 %v391
          %428 = vmatprep.subr.mxu0 %v394
          %429 = vmatpush1.msra.mxu0 %v393
          %430 = vmatprep.subr.mxu0 %v396
          %431 = vmatpush1.msra.mxu0 %v395
          %432 = vmatprep.subr.mxu0 %v398
          %433 = vmatpush1.msra.mxu0 %v397
          %434 = vmatprep.subr.mxu0 %v400
          %435 = vmatpush1.msra.mxu0 %v399
          %436 = vmatprep.subr.mxu0 %v402
          %437 = vmatpush1.msra.mxu0 %v401
          %438 = vmatprep.subr.mxu0 %v404
          %439 = vmatpush1.msra.mxu0 %v403
          %440 = vmatprep.subr.mxu0 %v406
          %441 = vmatpush1.msra.mxu0 %v405
          %442 = vmatprep.subr.mxu0 %v408
          %443 = vmatpush1.msra.mxu0 %v407
          %444 = vmatprep.subr.mxu0 %v410
          %445 = vmatpush1.msra.mxu0 %v409
          %446 = vmatprep.subr.mxu0 %v412
          %447 = vmatpush1.msra.mxu0 %v411
          %448 = vmatprep.subr.mxu0 %v414
          %449 = vmatpush1.msra.mxu0 %v413
          %450 = vmatprep.subr.mxu0 %v416
          %451 = vmatpush1.msra.mxu0 %v415
          %452 = vmatprep.subr.mxu0 %v418
          %453 = vmatpush1.msra.mxu0 %v417
          %454 = vmatprep.subr.mxu0 %v420
          %455 = vmatpush1.msra.mxu0 %v419
          %456 = vmatprep.subr.mxu0 %v422
          %457 = vmatpush1.msra.mxu0 %v421
          %458 = vmatprep.subr.mxu0 0.0
          %459 = vmatpush1.msra.mxu0 0.0
          %460 = vmatprep.subr.mxu0 0.0
          %461 = vmatpush1.msra.mxu0 0.0
          %462 = vmatprep.subr.mxu0 0.0
          %463 = vmatpush1.msra.mxu0 0.0
          %464 = vmatprep.subr.mxu0 0.0
          %465 = vmatpush1.msra.mxu0 0.0
          %466 = vmatprep.subr.mxu0 0.0
          %467 = vmatpush1.msra.mxu0 0.0
          %468 = vmatprep.subr.mxu0 0.0
          %469 = vmatpush1.msra.mxu0 0.0
          %470 = vmatprep.subr.mxu0 0.0
          %471 = vmatpush1.msra.mxu0 0.0
          %472 = vmatprep.subr.mxu0 0.0
          %473 = vmatpush1.msra.mxu0 0.0
          %474 = vmatprep.subr.mxu0 0.0
          %475 = vmatpush1.msra.mxu0 0.0
          %476 = vmatprep.subr.mxu0 0.0
          %477 = vmatpush1.msra.mxu0 0.0
          %478 = vmatprep.subr.mxu0 0.0
          %479 = vmatpush1.msra.mxu0 0.0
          %480 = vmatprep.subr.mxu0 0.0
          %481 = vmatpush1.msra.mxu0 0.0
          %482 = vmatprep.subr.mxu0 0.0
          %483 = vmatpush1.msra.mxu0 0.0
          %484 = vmatprep.subr.mxu0 0.0
          %485 = vmatpush1.msra.mxu0 0.0
          %486 = vmatprep.subr.mxu0 0.0
          %487 = vmatpush1.msra.mxu0 0.0
          %488 = vmatprep.subr.mxu0 0.0
          %489 = vmatpush1.msra.mxu0 0.0
          %490 = vmatprep.mubr.f32.mxu0 0.0
          %491 = vmatmul.mubr.f32.gmra.mrb[0].mxu0 %v424
          %v492 = vpop.f32.mrb[0].mxu0
          %v493 = vadd.f32 0.0, %v492
          %v494 = vpop.f32.mrb[0].mxu0
          %v495 = vadd.f32 0.0, %v494
          %496 = vdwg.mxu0
          %v499 = vcombine.low %v493, %v495
          %v501 = vunpack.c.l.s4 1983009808
          %v502 = vunpack.c.0.s8 %v501
          %v503 = vlaneseq
          %v504 = vshrl.u32 %v503, 7
          %v505 = vsub.s32 %v502, %v504
          %v506 = vrot.slane %v499, %v505
          %v508 = vadd.f32 %v390, %v506
          %509 = vst [vmem:[#allocation3] sm:$0xf] %v508
        $region56: #{f.1} parent=31 // pred_fallthru
          _
        %p510 = scmp.eq.s32.totalorder %s23, 1
        %p511 = pnand %p510, %p380
        %p512 = pneg %p511
        // Predicated region
        $region57: #{f.1} parent=31 // pred_check
          _
        $region58: #{f.1} parent=31 // pred_check_branch
          %514 = sbr.rel (%p511) target = $region60
        $region59: #{f.1} parent=31 // pred_region
          %v515 = vld [vmem:[#allocation3] sm:$0xf]
          %v516 = vand.u32 2147483647, %v515
          %v519 = vunpack.c.l.s4 1983009808
          %v520 = vunpack.c.0.s8 %v519
          %v521 = vlaneseq
          %v522 = vshrl.u32 %v521, 7
          %v523 = vsub.s32 %v520, %v522
          %v524 = vrot.slane %v516, %v523
          %v525 = vcombine.high %v524, %v524
          %vm528 = vcmask 1041408
          %v529 = vsel %vm528, %v524, 0.0
          %v530 = vsel %vm528, %v525, 0.0
          %v531 = vadd.f32 %v529, %v530
          %532 = vadd.xlane.f32.xlu0 %v531
          %v533 = vpop.xlane.xlu0 %532
          %v534 = vrot.slane %v533, 4
          %v535 = vadd.f32 %v533, %v534
          %v536 = vrot.slane %v535, 2
          %v537 = vadd.f32 %v535, %v536
          %v538 = vrot.slane %v537, 1
          %v539 = vadd.f32 %v537, %v538
          %s540 = vtos %v539
          %v541 = vstv %s540
          %vm542 = vcmask 0
          %543 = vst.msk [vmem:[#allocation9] sm:$0x1] %vm542, %v541
        $region60: #{f.1} parent=31 // pred_fallthru
          _
        // Predicated region
        $region61: #{f.1} parent=31 // pred_check
          %p544 = pneg %p125
        $region62: #{f.1} parent=31 // pred_check_branch
          %546 = sbr.rel (%p544) target = $region64
        $region63: #{f.1} parent=31 // pred_region
          %s548 = ssub.s32 16, 16
          %549 = vsyncadd [#allocation6], %s548
          %s551 = sshll.u32 [#allocation9], 4
          %s552 = int_to_ptr.vmem [resolvable:$true] %s551
          %554 = dma.vmem_to_hbm [thread:$0]  %s552, 16, %s3, [#allocation6]
        $region64: #{f.1} parent=31 // pred_fallthru
          _
        // Predicated region
        $region65: #{f.1} parent=31 // pred_check
          %p555 = pneg %p125
        $region66: #{f.1} parent=31 // pred_check_branch
          %557 = sbr.rel (%p555) target = $region68
        $region67: #{f.1} parent=31 // pred_region
          %558 = dma.done [#allocation6], 16
        $region68: #{f.1} parent=31 // pred_fallthru
          _
      $region32: #{f.1} parent=5 // pred_fallthru
        _
      %p559 = scmp.le.s32.totalorder 2, %s14
      // Predicated region
      $region69: #{f.1} parent=5 // pred_check
        %p560 = pneg %p559
      $region70: #{f.1} parent=5 // pred_check_branch
        %562 = sbr.rel (%p560) target = $region72
      $region71: #{f.1} parent=5 // pred_region
        %s563 = ssub.s32 %s14, 2
      $region72: #{f.1} parent=5 // pred_fallthru
        _
    $region6: #{f.1} parent=1 // loop_footer
      %s18 = sadd.s32 1, %s14
    $region7: #{f.1} parent=1 // loop_footer_branch
      %13 = sbr.rel target = $region3
    $region8: #{f.1} parent=1 // loop_exit
      _
    %564 = vsyncpa [#allocation5], 1
    %s565 = scalar_lea.sflag [#allocation5], 1
    %566 = vsyncpa %s565, 1
    %567 = vsyncpa [#allocation8], 1
    %s568 = scalar_lea.sflag [#allocation8], 1
    %569 = vsyncpa %s568, 1
    %570 = vsyncpa [#allocation6], 1
    %s571 = scalar_lea.sflag [#allocation6], 1
    %572 = vsyncpa %s571, 1

</llo_original>
